<compile_context>
chip_gen: v7x
topology: tpu7x:2x2x1
jax: 0.10.0
libtpu: 0.0.40
codegen_flags: <defaults>
</compile_context>

<pallas_src>
import jax
import jax.numpy as jnp
from jax.experimental import pallas as pl
from jax.experimental.pallas import tpu as pltpu


def _round_up(x, m):
    return ((x + m - 1) // m) * m


def _mt_wce_kernel(l1_ref, t1_ref, w1_ref, l2_ref, t2_ref, w2_ref, out_ref):
    """Per-tile partial weighted-CE for both heads.

    l*_ref: (TILE_N, C*) logits (any float dtype), t*_ref: (TILE_N, 1) int32
    targets (-1 => padded/ignored row), w*_ref: (1, C*) f32 class weights.
    out_ref: (1, 8, 128) f32; lanes 0..3 of sublane 0 hold
    [num1, den1, num2, den2] partials for this tile.
    """

    def partial_num_den(l_ref, t_ref, w_ref):
        logits = l_ref[...].astype(jnp.float32)              # (TILE_N, C)
        tgt = t_ref[...]                                      # (TILE_N, 1) i32
        w = w_ref[...].astype(jnp.float32)                    # (1, C)
        tn, c = logits.shape

        # numerically-stable log-softmax along the class (lane) axis
        m = jnp.max(logits, axis=-1, keepdims=True)           # (TILE_N, 1)
        lse = m + jnp.log(jnp.sum(jnp.exp(logits - m), axis=-1, keepdims=True))
        logp = logits - lse                                    # (TILE_N, C)

        # one-hot select of the per-sample class weight (single masked pass):
        # mw[i, j] = w[j] if targets[i] == j else 0
        cls = jax.lax.broadcasted_iota(jnp.int32, (tn, c), 1)  # (TILE_N, C)
        mw = jnp.where(cls == tgt, w, 0.0)                     # (TILE_N, C)

        num = -jnp.sum(mw * logp)                              # scalar
        den = jnp.sum(mw)                                      # scalar
        return num, den

    n1, d1 = partial_num_den(l1_ref, t1_ref, w1_ref)
    n2, d2 = partial_num_den(l2_ref, t2_ref, w2_ref)

    lane = jax.lax.broadcasted_iota(jnp.int32, (1, 8, 128), 2)
    vec = jnp.where(lane == 0, n1,
          jnp.where(lane == 1, d1,
          jnp.where(lane == 2, n2,
          jnp.where(lane == 3, d2, 0.0))))
    out_ref[...] = vec


def _prep_head(logits, targets, weights, n_pad):
    """Pad a head's batch axis to n_pad rows; padded targets are -1 (ignored)."""
    n, c = logits.shape
    targets = targets.astype(jnp.int32)
    if n_pad > n:
        logits = jnp.pad(logits, ((0, n_pad - n), (0, 0)))
        targets = jnp.pad(targets, (0, n_pad - n), constant_values=-1)
    return logits, targets.reshape(n_pad, 1), weights.astype(jnp.float32).reshape(1, c)


def _auto_tile_n(n_max, c_total, itemsize):
    # Keep double-buffered inputs + a few f32 temps well inside a 32 MiB scoped
    # VMEM budget (v7x: 64 MiB physical; v5e: 16 MiB default scoped limit).
    per_row = c_total * (2 * itemsize + 4 * 4)
    t = max(8, min(512, (8 << 20) // max(per_row, 1)))
    t = min(t, max(8, _round_up(n_max, 8)))
    return _round_up(t, 8)


def _ref_wce(logits, targets, weights):
    # Pure-JAX reference of weighted CE (mean reduction, PyTorch semantics).
    logits = logits.astype(jnp.float32)
    logp = jax.nn.log_softmax(logits, axis=-1)
    picked = jnp.take_along_axis(logp, targets[:, None].astype(jnp.int32), axis=-1)[:, 0]
    wi = weights.astype(jnp.float32)[targets]
    return jnp.sum(-wi * picked) / jnp.sum(wi)


def mt_loss(logits1, targets1, logits2, targets2, weights1, weights2,
            *, tile_n=None, use_pallas=None):
    """Equivalent of MT_loss.forward: stack of two weighted cross-entropies."""
    n1, c1 = logits1.shape
    n2, c2 = logits2.shape

    if use_pallas is None:
        # Tiny inputs: XLA-fused pure JAX beats a pallas_call launch.
        use_pallas = (logits1.size + logits2.size) >= 16384
    if not use_pallas:
        return jnp.stack((_ref_wce(logits1, targets1, weights1),
                          _ref_wce(logits2, targets2, weights2)))

    itemsize = max(jnp.dtype(logits1.dtype).itemsize, jnp.dtype(logits2.dtype).itemsize)
    if tile_n is None:
        tile_n = _auto_tile_n(max(n1, n2), c1 + c2, itemsize)
    tile_n = _round_up(max(int(tile_n), 8), 8)

    n_tiles = pl.cdiv(max(n1, n2), tile_n)
    n_pad = n_tiles * tile_n

    l1, t1, w1 = _prep_head(logits1, targets1, weights1, n_pad)
    l2, t2, w2 = _prep_head(logits2, targets2, weights2, n_pad)

    bytes_in = (n_pad * c1 * jnp.dtype(logits1.dtype).itemsize
                + n_pad * c2 * jnp.dtype(logits2.dtype).itemsize
                + 2 * n_pad * 4 + (c1 + c2) * 4)
    cost = pl.CostEstimate(
        flops=int(8 * n_pad * (c1 + c2)),
        transcendentals=int(n_pad * (c1 + c2) + 2 * n_pad),
        bytes_accessed=int(bytes_in + n_tiles * 8 * 128 * 4),
    )

    partials = pl.pallas_call(
        _mt_wce_kernel,
        out_shape=jax.ShapeDtypeStruct((n_tiles, 8, 128), jnp.float32),
        grid_spec=pltpu.PrefetchScalarGridSpec(
            num_scalar_prefetch=0,
            grid=(n_tiles,),
            in_specs=[
                pl.BlockSpec((tile_n, c1), lambda i: (i, 0)),
                pl.BlockSpec((tile_n, 1), lambda i: (i, 0)),
                pl.BlockSpec((1, c1), lambda i: (0, 0)),
                pl.BlockSpec((tile_n, c2), lambda i: (i, 0)),
                pl.BlockSpec((tile_n, 1), lambda i: (i, 0)),
                pl.BlockSpec((1, c2), lambda i: (0, 0)),
            ],
            out_specs=pl.BlockSpec((1, 8, 128), lambda i: (i, 0, 0)),
        ),
        compiler_params=pltpu.CompilerParams(
            dimension_semantics=("parallel",),
            vmem_limit_bytes=32 * 1024 * 1024,
        ),
        cost_estimate=cost,
    )(l1, t1, w1, l2, t2, w2)

    p = partials[:, 0, :]                                    # (n_tiles, 128)
    num1 = jnp.sum(p[:, 0])
    den1 = jnp.sum(p[:, 1])
    num2 = jnp.sum(p[:, 2])
    den2 = jnp.sum(p[:, 3])
    # Single global divide (empty tail tiles contribute 0 to both num and den).
    return jnp.stack((num1 / den1, num2 / den2))


if __name__ == "__main__":
    key = jax.random.PRNGKey(0)
    k1, k2, k3, k4, k5, k6 = jax.random.split(key, 6)

    N = 20          # batch (not tile-aligned -> exercises tail padding)
    C1 = 5          # classes, task 1
    C2 = 7          # classes, task 2

    logits1 = jax.random.normal(k1, (N, C1), dtype=jnp.float32)
    logits2 = jax.random.normal(k2, (N, C2), dtype=jnp.float32)
    targets1 = jax.random.randint(k3, (N,), 0, C1, dtype=jnp.int32)
    targets2 = jax.random.randint(k4, (N,), 0, C2, dtype=jnp.int32)
    weights1 = jax.random.uniform(k5, (C1,), dtype=jnp.float32, minval=0.5, maxval=2.0)
    weights2 = jax.random.uniform(k6, (C2,), dtype=jnp.float32, minval=0.5, maxval=2.0)

    # Force the Pallas path with a small tile so multi-tile partials + tail
    # padding are exercised at demo sizes.
    out = mt_loss(logits1, targets1, logits2, targets2, weights1, weights2,
                  tile_n=8, use_pallas=True)
    out = jax.block_until_ready(out)

    ref = jnp.stack((_ref_wce(logits1, targets1, weights1),
                     _ref_wce(logits2, targets2, weights2)))
    assert out.shape == (2,)
    assert jnp.allclose(out, ref, rtol=1e-4, atol=1e-5), (out, ref)

    # bf16 logits path: no wrapper-side f32 cast, cast happens inside kernel.
    out_bf = mt_loss(logits1.astype(jnp.bfloat16), targets1,
                     logits2.astype(jnp.bfloat16), targets2,
                     weights1, weights2, tile_n=8, use_pallas=True)
    out_bf = jax.block_until_ready(out_bf)
    ref_bf = jnp.stack((_ref_wce(logits1.astype(jnp.bfloat16), targets1, weights1),
                        _ref_wce(logits2.astype(jnp.bfloat16), targets2, weights2)))
    assert jnp.allclose(out_bf, ref_bf, rtol=5e-3, atol=5e-3), (out_bf, ref_bf)

    print("KERNEL_OK")
</pallas_src>

<mosaic_0001>
module attributes {stable_mosaic.version = 11 : i64} {
  func.func @_mt_wce_kernel(%arg0: i32, %arg1: memref<8x5xf32, #tpu.memory_space<vmem>>, %arg2: memref<8x1xi32, #tpu.memory_space<vmem>>, %arg3: memref<1x5xf32, #tpu.memory_space<vmem>>, %arg4: memref<8x7xf32, #tpu.memory_space<vmem>>, %arg5: memref<8x1xi32, #tpu.memory_space<vmem>>, %arg6: memref<1x7xf32, #tpu.memory_space<vmem>>, %arg7: memref<1x8x128xf32, #tpu.memory_space<vmem>>) attributes {dimension_semantics = [#tpu.dimension_semantics<parallel>], iteration_bounds = array<i64: 3>, scalar_prefetch = 0 : i64, scratch_operands = 0 : i64, tpu.core_type = #tpu.core_type<tc>, window_params = [{transform_indices = @transform_0, window_bounds = array<i64: 8, 5>}, {transform_indices = @transform_1, window_bounds = array<i64: 8, 1>}, {pipeline_mode = #tpu.pipeline_mode<synchronous>, transform_indices = @transform_2, window_bounds = array<i64: 1, 5>}, {transform_indices = @transform_3, window_bounds = array<i64: 8, 7>}, {transform_indices = @transform_4, window_bounds = array<i64: 8, 1>}, {pipeline_mode = #tpu.pipeline_mode<synchronous>, transform_indices = @transform_5, window_bounds = array<i64: 1, 7>}, {transform_indices = @transform_6, window_bounds = array<i64: 1, 8, 128>}]} {
    %c0 = arith.constant 0 : index
    %c0_0 = arith.constant 0 : index
    %0 = vector.load %arg1[%c0, %c0_0] : memref<8x5xf32, #tpu.memory_space<vmem>>, vector<8x5xf32>
    %c0_1 = arith.constant 0 : index
    %c0_2 = arith.constant 0 : index
    %1 = vector.load %arg2[%c0_1, %c0_2] : memref<8x1xi32, #tpu.memory_space<vmem>>, vector<8x1xi32>
    %c0_3 = arith.constant 0 : index
    %c0_4 = arith.constant 0 : index
    %2 = vector.load %arg3[%c0_3, %c0_4] : memref<1x5xf32, #tpu.memory_space<vmem>>, vector<1x5xf32>
    %cst = arith.constant dense<0xFF800000> : vector<8xf32>
    %3 = vector.multi_reduction <maximumf>, %0, %cst [1] : vector<8x5xf32> to vector<8xf32>
    %4 = vector.shape_cast %3 : vector<8xf32> to vector<8x1xf32>
    %5 = vector.broadcast %4 : vector<8x1xf32> to vector<8x5xf32>
    %6 = arith.subf %0, %5 : vector<8x5xf32>
    %7 = math.exp %6 : vector<8x5xf32>
    %cst_5 = arith.constant dense<0.000000e+00> : vector<8xf32>
    %8 = vector.multi_reduction <add>, %7, %cst_5 [1] : vector<8x5xf32> to vector<8xf32>
    %9 = vector.shape_cast %8 : vector<8xf32> to vector<8x1xf32>
    %10 = math.log %9 : vector<8x1xf32>
    %11 = arith.addf %4, %10 : vector<8x1xf32>
    %12 = vector.broadcast %11 : vector<8x1xf32> to vector<8x5xf32>
    %13 = arith.subf %0, %12 : vector<8x5xf32>
    %14 = tpu.iota {dimensions = array<i32: 1>} : vector<8x5xi32>
    %15 = vector.broadcast %1 : vector<8x1xi32> to vector<8x5xi32>
    %16 = arith.cmpi eq, %14, %15 : vector<8x5xi32>
    %cst_6 = arith.constant 0.000000e+00 : f32
    %17 = vector.shape_cast %2 : vector<1x5xf32> to vector<1x5xf32>
    %18 = vector.broadcast %17 : vector<1x5xf32> to vector<8x5xf32>
    %19 = vector.broadcast %cst_6 : f32 to vector<8x5xf32>
    %20 = arith.select %16, %18, %19 : vector<8x5xi1>, vector<8x5xf32>
    %21 = arith.mulf %20, %13 : vector<8x5xf32>
    %22 = vector.shape_cast %21 : vector<8x5xf32> to vector<1x8x5xf32>
    %cst_7 = arith.constant dense<0.000000e+00> : vector<1xf32>
    %23 = vector.multi_reduction <add>, %22, %cst_7 [1, 2] : vector<1x8x5xf32> to vector<1xf32>
    %24 = vector.shape_cast %23 : vector<1xf32> to vector<1x1x1xf32>
    %25 = vector.extract %24[0, 0, 0] : f32 from vector<1x1x1xf32>
    %cst_8 = arith.constant 0.000000e+00 : f32
    %26 = arith.subf %cst_8, %25 : f32
    %27 = vector.shape_cast %20 : vector<8x5xf32> to vector<1x8x5xf32>
    %cst_9 = arith.constant dense<0.000000e+00> : vector<1xf32>
    %28 = vector.multi_reduction <add>, %27, %cst_9 [1, 2] : vector<1x8x5xf32> to vector<1xf32>
    %29 = vector.shape_cast %28 : vector<1xf32> to vector<1x1x1xf32>
    %30 = vector.extract %29[0, 0, 0] : f32 from vector<1x1x1xf32>
    %c0_10 = arith.constant 0 : index
    %c0_11 = arith.constant 0 : index
    %31 = vector.load %arg4[%c0_10, %c0_11] : memref<8x7xf32, #tpu.memory_space<vmem>>, vector<8x7xf32>
    %c0_12 = arith.constant 0 : index
    %c0_13 = arith.constant 0 : index
    %32 = vector.load %arg5[%c0_12, %c0_13] : memref<8x1xi32, #tpu.memory_space<vmem>>, vector<8x1xi32>
    %c0_14 = arith.constant 0 : index
    %c0_15 = arith.constant 0 : index
    %33 = vector.load %arg6[%c0_14, %c0_15] : memref<1x7xf32, #tpu.memory_space<vmem>>, vector<1x7xf32>
    %cst_16 = arith.constant dense<0xFF800000> : vector<8xf32>
    %34 = vector.multi_reduction <maximumf>, %31, %cst_16 [1] : vector<8x7xf32> to vector<8xf32>
    %35 = vector.shape_cast %34 : vector<8xf32> to vector<8x1xf32>
    %36 = vector.broadcast %35 : vector<8x1xf32> to vector<8x7xf32>
    %37 = arith.subf %31, %36 : vector<8x7xf32>
    %38 = math.exp %37 : vector<8x7xf32>
    %cst_17 = arith.constant dense<0.000000e+00> : vector<8xf32>
    %39 = vector.multi_reduction <add>, %38, %cst_17 [1] : vector<8x7xf32> to vector<8xf32>
    %40 = vector.shape_cast %39 : vector<8xf32> to vector<8x1xf32>
    %41 = math.log %40 : vector<8x1xf32>
    %42 = arith.addf %35, %41 : vector<8x1xf32>
    %43 = vector.broadcast %42 : vector<8x1xf32> to vector<8x7xf32>
    %44 = arith.subf %31, %43 : vector<8x7xf32>
    %45 = tpu.iota {dimensions = array<i32: 1>} : vector<8x7xi32>
    %46 = vector.broadcast %32 : vector<8x1xi32> to vector<8x7xi32>
    %47 = arith.cmpi eq, %45, %46 : vector<8x7xi32>
    %cst_18 = arith.constant 0.000000e+00 : f32
    %48 = vector.shape_cast %33 : vector<1x7xf32> to vector<1x7xf32>
    %49 = vector.broadcast %48 : vector<1x7xf32> to vector<8x7xf32>
    %50 = vector.broadcast %cst_18 : f32 to vector<8x7xf32>
    %51 = arith.select %47, %49, %50 : vector<8x7xi1>, vector<8x7xf32>
    %52 = arith.mulf %51, %44 : vector<8x7xf32>
    %53 = vector.shape_cast %52 : vector<8x7xf32> to vector<1x8x7xf32>
    %cst_19 = arith.constant dense<0.000000e+00> : vector<1xf32>
    %54 = vector.multi_reduction <add>, %53, %cst_19 [1, 2] : vector<1x8x7xf32> to vector<1xf32>
    %55 = vector.shape_cast %54 : vector<1xf32> to vector<1x1x1xf32>
    %56 = vector.extract %55[0, 0, 0] : f32 from vector<1x1x1xf32>
    %cst_20 = arith.constant 0.000000e+00 : f32
    %57 = arith.subf %cst_20, %56 : f32
    %58 = vector.shape_cast %51 : vector<8x7xf32> to vector<1x8x7xf32>
    %cst_21 = arith.constant dense<0.000000e+00> : vector<1xf32>
    %59 = vector.multi_reduction <add>, %58, %cst_21 [1, 2] : vector<1x8x7xf32> to vector<1xf32>
    %60 = vector.shape_cast %59 : vector<1xf32> to vector<1x1x1xf32>
    %61 = vector.extract %60[0, 0, 0] : f32 from vector<1x1x1xf32>
    %62 = tpu.iota {dimensions = array<i32: 2>} : vector<1x8x128xi32>
    %c0_i32 = arith.constant 0 : i32
    %63 = vector.broadcast %c0_i32 : i32 to vector<1x8x128xi32>
    %64 = arith.cmpi eq, %62, %63 : vector<1x8x128xi32>
    %c1_i32 = arith.constant 1 : i32
    %65 = vector.broadcast %c1_i32 : i32 to vector<1x8x128xi32>
    %66 = arith.cmpi eq, %62, %65 : vector<1x8x128xi32>
    %c2_i32 = arith.constant 2 : i32
    %67 = vector.broadcast %c2_i32 : i32 to vector<1x8x128xi32>
    %68 = arith.cmpi eq, %62, %67 : vector<1x8x128xi32>
    %c3_i32 = arith.constant 3 : i32
    %69 = vector.broadcast %c3_i32 : i32 to vector<1x8x128xi32>
    %70 = arith.cmpi eq, %62, %69 : vector<1x8x128xi32>
    %cst_22 = arith.constant 0.000000e+00 : f32
    %71 = vector.broadcast %61 : f32 to vector<1x8x128xf32>
    %72 = vector.broadcast %cst_22 : f32 to vector<1x8x128xf32>
    %73 = arith.select %70, %71, %72 : vector<1x8x128xi1>, vector<1x8x128xf32>
    %74 = vector.broadcast %57 : f32 to vector<1x8x128xf32>
    %75 = arith.select %68, %74, %73 : vector<1x8x128xi1>, vector<1x8x128xf32>
    %76 = vector.broadcast %30 : f32 to vector<1x8x128xf32>
    %77 = arith.select %66, %76, %75 : vector<1x8x128xi1>, vector<1x8x128xf32>
    %78 = vector.broadcast %26 : f32 to vector<1x8x128xf32>
    %79 = arith.select %64, %78, %77 : vector<1x8x128xi1>, vector<1x8x128xf32>
    %c0_23 = arith.constant 0 : index
    %c0_24 = arith.constant 0 : index
    %c0_25 = arith.constant 0 : index
    %80 = vector.load %arg7[%c0_23, %c0_24, %c0_25] : memref<1x8x128xf32, #tpu.memory_space<vmem>>, vector<1x8x128xf32>
    tpu.vector_store %arg7[%c0_23, %c0_24, %c0_25], %79 {strides = array<i32>} : memref<1x8x128xf32, #tpu.memory_space<vmem>>, vector<1x8x128xf32>,
    return
  }
  func.func @transform_0(%arg0: i32) -> (i32, i32) {
    %c0_i32 = arith.constant 0 : i32
    %c0_i32_0 = arith.constant 0 : i32
    return %arg0, %c0_i32 : i32, i32
  }
  func.func @transform_1(%arg0: i32) -> (i32, i32) {
    %c0_i32 = arith.constant 0 : i32
    %c0_i32_0 = arith.constant 0 : i32
    return %arg0, %c0_i32 : i32, i32
  }
  func.func @transform_2(%arg0: i32) -> (i32, i32) {
    %c0_i32 = arith.constant 0 : i32
    %c0_i32_0 = arith.constant 0 : i32
    %c0_i32_1 = arith.constant 0 : i32
    return %c0_i32, %c0_i32_0 : i32, i32
  }
  func.func @transform_3(%arg0: i32) -> (i32, i32) {
    %c0_i32 = arith.constant 0 : i32
    %c0_i32_0 = arith.constant 0 : i32
    return %arg0, %c0_i32 : i32, i32
  }
  func.func @transform_4(%arg0: i32) -> (i32, i32) {
    %c0_i32 = arith.constant 0 : i32
    %c0_i32_0 = arith.constant 0 : i32
    return %arg0, %c0_i32 : i32, i32
  }
  func.func @transform_5(%arg0: i32) -> (i32, i32) {
    %c0_i32 = arith.constant 0 : i32
    %c0_i32_0 = arith.constant 0 : i32
    %c0_i32_1 = arith.constant 0 : i32
    return %c0_i32, %c0_i32_0 : i32, i32
  }
  func.func @transform_6(%arg0: i32) -> (i32, i32, i32) {
    %c0_i32 = arith.constant 0 : i32
    %c0_i32_0 = arith.constant 0 : i32
    %c0_i32_1 = arith.constant 0 : i32
    return %arg0, %c0_i32, %c0_i32_0 : i32, i32, i32
  }
}

</mosaic_0001>

<llo_original>
// kernel: tpu_custom_call.1
$region0: #{tpu_custom_call.1}
  #allocation0 [shape = 'u32[]', space=smem, size = 0x4, offset = 0x4, fixed_abs, tag = 'smem constant byte address 0x4 - core index']
  #allocation1 [shape = 'u32[144,128]{1,0:T(1,128)}', space=vmem, size = 0x12000, scoped, tag = 'internal scratch']
  %s0 = inlined_call_operand.vmem [shape: f32[24,5], index: 0, kind: input, shape index: {}]
  %s1 = inlined_call_operand.vmem [shape: s32[24,1], index: 1, kind: input, shape index: {}]
  %s2 = inlined_call_operand.vmem [shape: f32[1,5], index: 2, kind: input, shape index: {}]
  %s3 = inlined_call_operand.vmem [shape: f32[24,7], index: 3, kind: input, shape index: {}]
  %s4 = inlined_call_operand.vmem [shape: s32[24,1], index: 4, kind: input, shape index: {}]
  %s5 = inlined_call_operand.vmem [shape: f32[1,7], index: 5, kind: input, shape index: {}]
  %s6 = inlined_call_operand.hbm [shape: f32[3,8,128], index: 6, kind: output, shape index: {}]
  %s7 = sld [smem:[#allocation0]]
  $region57: #{tpu_custom_call.1} parent=0
    _
  %s9 = ssub.s32 1, %s7
  %s10 = scalar_select 0, %s9, %s7
  $region1: #{tpu_custom_call.1} parent=0
    #allocation2 [shape = 'u8[8192]{0}', space=vmem, size = 0x2000, scoped, tag = 'output window, operand 0']
    #allocation3 [shape = 's32[2]{0}', space=sflag, size = 0x8, scoped, tag = 'scoped memory for tpu_custom_call.1']
    %11 = vsyncpa [#allocation3], 0
    %s12 = scalar_lea.sflag [#allocation3], 1
    %13 = vsyncpa %s12, 0
    loop: start=0, step=1, limit=5
    $region2: #{tpu_custom_call.1} parent=1 // loop_pre_header
      _
    $region3: #{tpu_custom_call.1} parent=1 // loop_header
      %s15 = sphi 0, %s19
      %p16 = scmp.ge.s32.totalorder %s15, 5
      %s25 = sphi 0, %s27
      %s28 = sphi 0, %s25
      %s29 = sphi 0, %s28
      %s45 = sphi 0, %s29
      %s51 = sphi 0, %s53
      %s54 = sphi 0, %s51
      %s55 = sphi 0, %s54
      %s71 = sphi 0, %s55
      %s75 = sphi 0, %s75
      %s77 = sphi 0, %s75
      %s78 = sphi 0, %s77
      %s92 = sphi 0, %s78
      %s98 = sphi 0, %s100
      %s101 = sphi 0, %s98
      %s102 = sphi 0, %s101
      %s118 = sphi 0, %s102
      %s124 = sphi 0, %s126
      %s127 = sphi 0, %s124
      %s128 = sphi 0, %s127
      %s144 = sphi 0, %s128
      %s148 = sphi 0, %s148
      %s150 = sphi 0, %s148
      %s151 = sphi 0, %s150
      %s165 = sphi 0, %s151
      %s171 = sphi 0, %s173
      %s174 = sphi 0, %s171
      %s175 = sphi 0, %s174
      %s191 = sphi 0, %s175
    $region4: #{tpu_custom_call.1} parent=1 // loop_header_branch
      %18 = sbr.rel (%p16) target = $region8
    $region5: #{tpu_custom_call.1} parent=1 // loop_body
      %s20 = ssub.s32 %s15, 1
      %s21 = ssub.s32 %s15, 2
      %s22 = sadd.s32 %s15, 1
      %s23 = ssub.s32 %s15, %s22
      %p24 = scmp.eq.s32.totalorder %s23, 0
      %s26 = sadd.s32 %s25, 1
      %s27 = scalar_select %p24, %s25, %s26
      %p30 = pneg %p24
      %p31 = scmp.eq.s32.totalorder %s15, 2
      %p32 = por %p30, %p31
      %p33 = scmp.ne.s32.totalorder %s25, %s28
      %p34 = scmp.eq.s32.totalorder %s15, 0
      %p35 = por %p33, %p34
      %p36 = scmp.ne.s32.totalorder %s25, %s28
      %p37 = scmp.eq.s32.totalorder %s20, 2
      %p38 = por %p36, %p37
      %p39 = scmp.ne.s32.totalorder %s28, %s29
      %p40 = scmp.eq.s32.totalorder %s20, 0
      %p41 = por %p39, %p40
      %p42 = scmp.ne.s32.totalorder %s28, %s29
      %p43 = scmp.eq.s32.totalorder %s21, 2
      %p44 = por %p42, %p43
      %p46 = scmp.ne.s32.totalorder %s29, %s45
      %p47 = scmp.eq.s32.totalorder %s21, 0
      %p48 = por %p46, %p47
      %s49 = ssub.s32 %s15, %s22
      %p50 = scmp.eq.s32.totalorder %s49, 0
      %s52 = sadd.s32 %s51, 1
      %s53 = scalar_select %p50, %s51, %s52
      %p56 = pneg %p50
      %p57 = scmp.eq.s32.totalorder %s15, 2
      %p58 = por %p56, %p57
      %p59 = scmp.ne.s32.totalorder %s51, %s54
      %p60 = scmp.eq.s32.totalorder %s15, 0
      %p61 = por %p59, %p60
      %p62 = scmp.ne.s32.totalorder %s51, %s54
      %p63 = scmp.eq.s32.totalorder %s20, 2
      %p64 = por %p62, %p63
      %p65 = scmp.ne.s32.totalorder %s54, %s55
      %p66 = scmp.eq.s32.totalorder %s20, 0
      %p67 = por %p65, %p66
      %p68 = scmp.ne.s32.totalorder %s54, %s55
      %p69 = scmp.eq.s32.totalorder %s21, 2
      %p70 = por %p68, %p69
      %p72 = scmp.ne.s32.totalorder %s55, %s71
      %p73 = scmp.eq.s32.totalorder %s21, 0
      %p74 = por %p72, %p73
      %s76 = sadd.s32 %s75, 1
      %p79 = scmp.eq.s32.totalorder %s15, 2
      %p80 = scmp.ne.s32.totalorder %s75, %s77
      %p81 = scmp.eq.s32.totalorder %s15, 0
      %p82 = por %p80, %p81
      %p83 = scmp.ne.s32.totalorder %s75, %s77
      %p84 = scmp.eq.s32.totalorder %s20, 2
      %p85 = por %p83, %p84
      %p86 = scmp.ne.s32.totalorder %s77, %s78
      %p87 = scmp.eq.s32.totalorder %s20, 0
      %p88 = por %p86, %p87
      %p89 = scmp.ne.s32.totalorder %s77, %s78
      %p90 = scmp.eq.s32.totalorder %s21, 2
      %p91 = por %p89, %p90
      %p93 = scmp.ne.s32.totalorder %s78, %s92
      %p94 = scmp.eq.s32.totalorder %s21, 0
      %p95 = por %p93, %p94
      %s96 = ssub.s32 %s15, %s22
      %p97 = scmp.eq.s32.totalorder %s96, 0
      %s99 = sadd.s32 %s98, 1
      %s100 = scalar_select %p97, %s98, %s99
      %p103 = pneg %p97
      %p104 = scmp.eq.s32.totalorder %s15, 2
      %p105 = por %p103, %p104
      %p106 = scmp.ne.s32.totalorder %s98, %s101
      %p107 = scmp.eq.s32.totalorder %s15, 0
      %p108 = por %p106, %p107
      %p109 = scmp.ne.s32.totalorder %s98, %s101
      %p110 = scmp.eq.s32.totalorder %s20, 2
      %p111 = por %p109, %p110
      %p112 = scmp.ne.s32.totalorder %s101, %s102
      %p113 = scmp.eq.s32.totalorder %s20, 0
      %p114 = por %p112, %p113
      %p115 = scmp.ne.s32.totalorder %s101, %s102
      %p116 = scmp.eq.s32.totalorder %s21, 2
      %p117 = por %p115, %p116
      %p119 = scmp.ne.s32.totalorder %s102, %s118
      %p120 = scmp.eq.s32.totalorder %s21, 0
      %p121 = por %p119, %p120
      %s122 = ssub.s32 %s15, %s22
      %p123 = scmp.eq.s32.totalorder %s122, 0
      %s125 = sadd.s32 %s124, 1
      %s126 = scalar_select %p123, %s124, %s125
      %p129 = pneg %p123
      %p130 = scmp.eq.s32.totalorder %s15, 2
      %p131 = por %p129, %p130
      %p132 = scmp.ne.s32.totalorder %s124, %s127
      %p133 = scmp.eq.s32.totalorder %s15, 0
      %p134 = por %p132, %p133
      %p135 = scmp.ne.s32.totalorder %s124, %s127
      %p136 = scmp.eq.s32.totalorder %s20, 2
      %p137 = por %p135, %p136
      %p138 = scmp.ne.s32.totalorder %s127, %s128
      %p139 = scmp.eq.s32.totalorder %s20, 0
      %p140 = por %p138, %p139
      %p141 = scmp.ne.s32.totalorder %s127, %s128
      %p142 = scmp.eq.s32.totalorder %s21, 2
      %p143 = por %p141, %p142
      %p145 = scmp.ne.s32.totalorder %s128, %s144
      %p146 = scmp.eq.s32.totalorder %s21, 0
      %p147 = por %p145, %p146
      %s149 = sadd.s32 %s148, 1
      %p152 = scmp.eq.s32.totalorder %s15, 2
      %p153 = scmp.ne.s32.totalorder %s148, %s150
      %p154 = scmp.eq.s32.totalorder %s15, 0
      %p155 = por %p153, %p154
      %p156 = scmp.ne.s32.totalorder %s148, %s150
      %p157 = scmp.eq.s32.totalorder %s20, 2
      %p158 = por %p156, %p157
      %p159 = scmp.ne.s32.totalorder %s150, %s151
      %p160 = scmp.eq.s32.totalorder %s20, 0
      %p161 = por %p159, %p160
      %p162 = scmp.ne.s32.totalorder %s150, %s151
      %p163 = scmp.eq.s32.totalorder %s21, 2
      %p164 = por %p162, %p163
      %p166 = scmp.ne.s32.totalorder %s151, %s165
      %p167 = scmp.eq.s32.totalorder %s21, 0
      %p168 = por %p166, %p167
      %s169 = ssub.s32 %s15, %s22
      %p170 = scmp.eq.s32.totalorder %s169, 0
      %s172 = sadd.s32 %s171, 1
      %s173 = scalar_select %p170, %s171, %s172
      %p176 = pneg %p170
      %p177 = scmp.eq.s32.totalorder %s15, 2
      %p178 = por %p176, %p177
      %p179 = scmp.ne.s32.totalorder %s171, %s174
      %p180 = scmp.eq.s32.totalorder %s15, 0
      %p181 = por %p179, %p180
      %p182 = scmp.ne.s32.totalorder %s171, %s174
      %p183 = scmp.eq.s32.totalorder %s20, 2
      %p184 = por %p182, %p183
      %p185 = scmp.ne.s32.totalorder %s174, %s175
      %p186 = scmp.eq.s32.totalorder %s20, 0
      %p187 = por %p185, %p186
      %p188 = scmp.ne.s32.totalorder %s174, %s175
      %p189 = scmp.eq.s32.totalorder %s21, 2
      %p190 = por %p188, %p189
      %p192 = scmp.ne.s32.totalorder %s175, %s191
      %p193 = scmp.eq.s32.totalorder %s21, 0
      %p194 = por %p192, %p193
      %p195 = scmp.le.s32.totalorder 1, %s15
      %p196 = scmp.lt.s32.totalorder %s15, 4
      %p197 = pnand %p195, %p196
      %p198 = pneg %p197
      // Predicated region
      $region9: #{tpu_custom_call.1} parent=5 // pred_check
        _
      $region10: #{tpu_custom_call.1} parent=5 // pred_check_branch
        %200 = sbr.rel (%p197) target = $region12
      $region11: #{tpu_custom_call.1} parent=5 // pred_region
        %s201 = ssub.s32 %s15, 1
        // Predicated region
        $region13: #{tpu_custom_call.1} parent=11 // pred_check
          %p202 = pneg %p88
        $region14: #{tpu_custom_call.1} parent=11 // pred_check_branch
          %204 = sbr.rel (%p202) target = $region16
        $region15: #{tpu_custom_call.1} parent=11 // pred_region
          _
        $region16: #{tpu_custom_call.1} parent=11 // pred_fallthru
          _
        // Predicated region
        $region17: #{tpu_custom_call.1} parent=11 // pred_check
          %p205 = pneg %p161
        $region18: #{tpu_custom_call.1} parent=11 // pred_check_branch
          %207 = sbr.rel (%p205) target = $region20
        $region19: #{tpu_custom_call.1} parent=11 // pred_region
          _
        $region20: #{tpu_custom_call.1} parent=11 // pred_fallthru
          _
      $region12: #{tpu_custom_call.1} parent=5 // pred_fallthru
        _
      %p208 = scmp.lt.s32.totalorder %s15, 3
      // Predicated region
      $region21: #{tpu_custom_call.1} parent=5 // pred_check
        %p209 = pneg %p208
      $region22: #{tpu_custom_call.1} parent=5 // pred_check_branch
        %211 = sbr.rel (%p209) target = $region24
      $region23: #{tpu_custom_call.1} parent=5 // pred_region
        // Predicated region
        $region25: #{tpu_custom_call.1} parent=23 // pred_check
          %p212 = pneg %p35
        $region26: #{tpu_custom_call.1} parent=23 // pred_check_branch
          %214 = sbr.rel (%p212) target = $region28
        $region27: #{tpu_custom_call.1} parent=23 // pred_region
          %p215 = scmp.lt.s32.totalorder %s15, 2
          %s216 = scalar_select %p215, %s15, 2
          %s217 = smul.addr %s216, 8
          %s218 = scalar_lea.vmem %s0, %s217
        $region28: #{tpu_custom_call.1} parent=23 // pred_fallthru
          _
        // Predicated region
        $region29: #{tpu_custom_call.1} parent=23 // pred_check
          %p219 = pneg %p61
        $region30: #{tpu_custom_call.1} parent=23 // pred_check_branch
          %221 = sbr.rel (%p219) target = $region32
        $region31: #{tpu_custom_call.1} parent=23 // pred_region
          %p222 = scmp.lt.s32.totalorder %s15, 2
          %s223 = scalar_select %p222, %s15, 2
          %s224 = smul.addr %s223, 8
          %s225 = scalar_lea.vmem %s1, %s224
        $region32: #{tpu_custom_call.1} parent=23 // pred_fallthru
          _
        // Predicated region
        $region33: #{tpu_custom_call.1} parent=23 // pred_check
          %p226 = pneg %p108
        $region34: #{tpu_custom_call.1} parent=23 // pred_check_branch
          %228 = sbr.rel (%p226) target = $region36
        $region35: #{tpu_custom_call.1} parent=23 // pred_region
          %p229 = scmp.lt.s32.totalorder %s15, 2
          %s230 = scalar_select %p229, %s15, 2
          %s231 = smul.addr %s230, 8
          %s232 = scalar_lea.vmem %s3, %s231
        $region36: #{tpu_custom_call.1} parent=23 // pred_fallthru
          _
        // Predicated region
        $region37: #{tpu_custom_call.1} parent=23 // pred_check
          %p233 = pneg %p134
        $region38: #{tpu_custom_call.1} parent=23 // pred_check_branch
          %235 = sbr.rel (%p233) target = $region40
        $region39: #{tpu_custom_call.1} parent=23 // pred_region
          %p236 = scmp.lt.s32.totalorder %s15, 2
          %s237 = scalar_select %p236, %s15, 2
          %s238 = smul.addr %s237, 8
          %s239 = scalar_lea.vmem %s4, %s238
        $region40: #{tpu_custom_call.1} parent=23 // pred_fallthru
          _
      $region24: #{tpu_custom_call.1} parent=5 // pred_fallthru
        _
      %p240 = scmp.le.s32.totalorder 1, %s15
      %p241 = scmp.lt.s32.totalorder %s15, 4
      %p242 = pnand %p240, %p241
      %p243 = pneg %p242
      // Predicated region
      $region41: #{tpu_custom_call.1} parent=5 // pred_check
        _
      $region42: #{tpu_custom_call.1} parent=5 // pred_check_branch
        %245 = sbr.rel (%p242) target = $region44
      $region43: #{tpu_custom_call.1} parent=5 // pred_region
        %s246 = ssub.s32 %s15, 1
        %p247 = scmp.lt.s32.totalorder %s20, 2
        %s248 = scalar_select %p247, %s20, 2
        %s249 = smul.addr %s248, 8
        %s250 = scalar_lea.vmem %s0, %s249
        %p251 = pneg %p41
        %p252 = pneg %p38
        %p253 = scmp.lt.s32.totalorder %s20, 2
        %s254 = scalar_select %p253, %s20, 2
        %s255 = smul.addr %s254, 8
        %s256 = scalar_lea.vmem %s1, %s255
        %p257 = pneg %p67
        %p258 = pneg %p64
        %p259 = pneg %p88
        %p260 = pneg %p85
        %p261 = scmp.lt.s32.totalorder %s20, 2
        %s262 = scalar_select %p261, %s20, 2
        %s263 = smul.addr %s262, 8
        %s264 = scalar_lea.vmem %s3, %s263
        %p265 = pneg %p114
        %p266 = pneg %p111
        %p267 = scmp.lt.s32.totalorder %s20, 2
        %s268 = scalar_select %p267, %s20, 2
        %s269 = smul.addr %s268, 8
        %s270 = scalar_lea.vmem %s4, %s269
        %p271 = pneg %p140
        %p272 = pneg %p137
        %p273 = pneg %p161
        %p274 = pneg %p158
        %p275 = pneg %p187
        %p276 = pneg %p184
        %s277 = sand.u32 %s174, 1
        %s278 = scalar_lea.sflag [#allocation3], %s277
        %s279 = sand.u32 %s174, 1
        %s280 = smul.addr %s279, 8
        %s281 = scalar_lea.vmem [#allocation2], %s280
        %p282 = scmp.lt.s32.totalorder %s20, 2
        %s283 = scalar_select %p282, %s20, 2
        %s284 = smul.addr %s283, 8
        %s285 = scalar_lea.vmem %s0, %s284
        %p286 = scmp.lt.s32.totalorder %s20, 2
        %s287 = scalar_select %p286, %s20, 2
        %s288 = smul.addr %s287, 8
        %s289 = scalar_lea.vmem %s1, %s288
        %p290 = scmp.lt.s32.totalorder %s20, 2
        %s291 = scalar_select %p290, %s20, 2
        %s292 = smul.addr %s291, 8
        %s293 = scalar_lea.vmem %s3, %s292
        %p294 = scmp.lt.s32.totalorder %s20, 2
        %s295 = scalar_select %p294, %s20, 2
        %s296 = smul.addr %s295, 8
        %s297 = scalar_lea.vmem %s4, %s296
        %v298 = vld [vmem:[%s285] sm:$0xff]
        %v299 = vld [vmem:[%s289] sm:$0xff]
        %v300 = vld [vmem:[%s2] sm:$0x1]
        %vm301 = vcmask 39936
        %v302 = vsel %vm301, %v298, -inf
        %303 = vmax.xlane.f32.xlu0 %v302
        %v304 = vpop.xlane.xlu0 %303
        %v305 = vsub.f32 %v298, %v304
        %v306 = vmul.f32 %v305, 1.442695
        %v307 = vpow.pop %v306
        %v308 = vsel %vm301, %v307, 0.0
        %309 = vadd.xlane.f32.xlu0 %v308
        %v310 = vpop.xlane.xlu0 %309
        %v311 = vlog2.pop %v310
        %v312 = vmul.f32 %v311, 0.6931472
        %v313 = vadd.f32 %v304, %v312
        %v314 = vsub.f32 %v298, %v313
        %v315 = vlaneseq
        %v316 = vand.u32 %v315, 127
        %317 = vset.pattern.permute.xlu0 0
        %318 = vperm.xlu0 %317, %v299
        %v319 = vpop.permute.xlu0 %318
        %vm320 = vcmp.eq.s32.totalorder %v316, %v319
        %v322 = vlaneseq
        %v323 = vshrl.u32 %v322, 7
        %v324 = vsub.s32 0, %v323
        %v325 = vrot.slane %v300, %v324
        %v327 = vsel %vm320, %v325, 0.0
        %v328 = vmul.f32 %v327, %v314
        %v329 = vsel %vm301, %v328, 0.0
        %330 = vadd.xlane.f32.xlu0 %v329
        %v331 = vpop.xlane.xlu0 %330
        %v332 = vrot.slane %v331, 4
        %v333 = vadd.f32 %v331, %v332
        %v334 = vrot.slane %v333, 2
        %v335 = vadd.f32 %v333, %v334
        %v336 = vrot.slane %v335, 1
        %v337 = vadd.f32 %v335, %v336
        %s338 = vtos %v337
        %s339 = ssub.f32 0.0, %s338
        %v340 = vsel %vm301, %v327, 0.0
        %341 = vadd.xlane.f32.xlu0 %v340
        %v342 = vpop.xlane.xlu0 %341
        %v343 = vrot.slane %v342, 4
        %v344 = vadd.f32 %v342, %v343
        %v345 = vrot.slane %v344, 2
        %v346 = vadd.f32 %v344, %v345
        %v347 = vrot.slane %v346, 1
        %v348 = vadd.f32 %v346, %v347
        %s349 = vtos %v348
        %v350 = vld [vmem:[%s293] sm:$0xff]
        %v351 = vld [vmem:[%s297] sm:$0xff]
        %v352 = vld [vmem:[%s5] sm:$0x1]
        %vm353 = vcmask 56320
        %v354 = vsel %vm353, %v350, -inf
        %355 = vmax.xlane.f32.xlu0 %v354
        %v356 = vpop.xlane.xlu0 %355
        %v357 = vsub.f32 %v350, %v356
        %v358 = vmul.f32 %v357, 1.442695
        %v359 = vpow.pop %v358
        %v360 = vsel %vm353, %v359, 0.0
        %361 = vadd.xlane.f32.xlu0 %v360
        %v362 = vpop.xlane.xlu0 %361
        %v363 = vlog2.pop %v362
        %v364 = vmul.f32 %v363, 0.6931472
        %v365 = vadd.f32 %v356, %v364
        %v366 = vsub.f32 %v350, %v365
        %367 = vset.pattern.permute.xlu0 0
        %368 = vperm.xlu0 %367, %v351
        %v369 = vpop.permute.xlu0 %368
        %vm370 = vcmp.eq.s32.totalorder %v316, %v369
        %v372 = vlaneseq
        %v373 = vshrl.u32 %v372, 7
        %v374 = vsub.s32 0, %v373
        %v375 = vrot.slane %v352, %v374
        %v377 = vsel %vm370, %v375, 0.0
        %v378 = vmul.f32 %v377, %v366
        %v379 = vsel %vm353, %v378, 0.0
        %380 = vadd.xlane.f32.xlu0 %v379
        %v381 = vpop.xlane.xlu0 %380
        %v382 = vrot.slane %v381, 4
        %v383 = vadd.f32 %v381, %v382
        %v384 = vrot.slane %v383, 2
        %v385 = vadd.f32 %v383, %v384
        %v386 = vrot.slane %v385, 1
        %v387 = vadd.f32 %v385, %v386
        %s388 = vtos %v387
        %s389 = ssub.f32 0.0, %s388
        %v390 = vsel %vm353, %v377, 0.0
        %391 = vadd.xlane.f32.xlu0 %v390
        %v392 = vpop.xlane.xlu0 %391
        %v393 = vrot.slane %v392, 4
        %v394 = vadd.f32 %v392, %v393
        %v395 = vrot.slane %v394, 2
        %v396 = vadd.f32 %v394, %v395
        %v397 = vrot.slane %v396, 1
        %v398 = vadd.f32 %v396, %v397
        %s399 = vtos %v398
        %vm400 = vcmp.eq.s32.totalorder %v316, 0
        %vm401 = vcmp.eq.s32.totalorder %v316, 1
        %vm402 = vcmp.eq.s32.totalorder %v316, 2
        %vm403 = vcmp.eq.s32.totalorder %v316, 3
        %v404 = vstv %s399
        %v405 = vsel %vm403, %v404, 0.0
        %v406 = vstv %s389
        %v407 = vsel %vm402, %v406, %v405
        %v408 = vstv %s349
        %v409 = vsel %vm401, %v408, %v407
        %v410 = vstv %s339
        %v411 = vsel %vm400, %v410, %v409
        %412 = vst [vmem:[%s281] sm:$0xff] %v411
        %s413 = sand.u32 %s174, 1
        %s414 = scalar_lea.sflag [#allocation3], %s413
        %s415 = sand.u32 %s174, 1
        %s416 = smul.addr %s415, 8
        %s417 = scalar_lea.vmem [#allocation2], %s416
        // Predicated region
        $region45: #{tpu_custom_call.1} parent=43 // pred_check
          %p418 = pneg %p184
        $region46: #{tpu_custom_call.1} parent=43 // pred_check_branch
          %420 = sbr.rel (%p418) target = $region48
        $region47: #{tpu_custom_call.1} parent=43 // pred_region
          %s422 = ssub.s32 128, 128
          %423 = vsyncadd %s414, %s422
          %s424 = smul.addr %s20, 128
          %s425 = scalar_lea.hbm %s6, %s424
          %s427 = sshll.u32 %s417, 4
          %s428 = int_to_ptr.vmem [resolvable:$true] %s427
          %430 = dma.vmem_to_hbm [thread:$0]  %s428, 128, %s425, %s414
        $region48: #{tpu_custom_call.1} parent=43 // pred_fallthru
          _
      $region44: #{tpu_custom_call.1} parent=5 // pred_fallthru
        _
      %p431 = scmp.le.s32.totalorder 2, %s15
      // Predicated region
      $region49: #{tpu_custom_call.1} parent=5 // pred_check
        %p432 = pneg %p431
      $region50: #{tpu_custom_call.1} parent=5 // pred_check_branch
        %434 = sbr.rel (%p432) target = $region52
      $region51: #{tpu_custom_call.1} parent=5 // pred_region
        %s435 = ssub.s32 %s15, 2
        // Predicated region
        $region53: #{tpu_custom_call.1} parent=51 // pred_check
          %p436 = pneg %p190
        $region54: #{tpu_custom_call.1} parent=51 // pred_check_branch
          %438 = sbr.rel (%p436) target = $region56
        $region55: #{tpu_custom_call.1} parent=51 // pred_region
          %s439 = sand.u32 %s175, 1
          %s440 = scalar_lea.sflag [#allocation3], %s439
          %s441 = sand.u32 %s175, 1
          %s442 = smul.addr %s441, 8
          %s443 = scalar_lea.vmem [#allocation2], %s442
          %444 = dma.done %s440, 128
        $region56: #{tpu_custom_call.1} parent=51 // pred_fallthru
          _
      $region52: #{tpu_custom_call.1} parent=5 // pred_fallthru
        _
    $region6: #{tpu_custom_call.1} parent=1 // loop_footer
      %s19 = sadd.s32 1, %s15
    $region7: #{tpu_custom_call.1} parent=1 // loop_footer_branch
      %14 = sbr.rel target = $region3
    $region8: #{tpu_custom_call.1} parent=1 // loop_exit
      _
    %445 = vsyncpa [#allocation3], 1
    %s446 = scalar_lea.sflag [#allocation3], 1
    %447 = vsyncpa %s446, 1

</llo_original>
